<compile_context>
chip_gen: v7x
topology: tpu7x:2x2x1
jax: 0.10.0
libtpu: 0.0.40
codegen_flags: <defaults>
</compile_context>

<pallas_src>
import numpy as np
import jax
import jax.numpy as jnp
from jax.experimental import pallas as pl
from jax.experimental.pallas import tpu as pltpu


# ----------------------------------------------------------------------------
# helpers
# ----------------------------------------------------------------------------

def _round_up(x, m):
    return ((x + m - 1) // m) * m


def _pick_div(total, candidates):
    """Largest candidate that divides `total` (fallback: total itself)."""
    for c in candidates:
        if c <= total and total % c == 0:
            return c
    return total


# ----------------------------------------------------------------------------
# Pallas kernels
# ----------------------------------------------------------------------------

def _conv_kernel_single_k(w_ref, x_ref, b_ref, o_ref):
    """out(tn, tm) = W(tn, K) @ slab(K, tm) + bias  (whole K in one block)."""
    acc = jnp.dot(w_ref[...], x_ref[...], preferred_element_type=jnp.float32)
    o_ref[...] = (acc + b_ref[...]).astype(o_ref.dtype)


def _conv_kernel_multi_k(w_ref, x_ref, b_ref, o_ref, acc_ref):
    """Tiled-K variant with an f32 accumulator across the 'arbitrary' K axis."""
    k = pl.program_id(3)

    @pl.when(k == 0)
    def _init():
        acc_ref[...] = jnp.zeros_like(acc_ref)

    acc_ref[...] += jnp.dot(w_ref[...], x_ref[...],
                            preferred_element_type=jnp.float32)

    @pl.when(k == pl.num_programs(3) - 1)
    def _finalize():
        o_ref[...] = (acc_ref[...] + b_ref[...]).astype(o_ref.dtype)


def _avgpool_kernel(x_ref, q_ref, o_ref):
    """2x2/stride-2 mean: each row [even-h | odd-h] contracted with the pooling
    matrix q (one small MXU op does the lane compaction + reduction)."""
    o_ref[...] = jnp.dot(x_ref[...], q_ref[...],
                         preferred_element_type=jnp.float32).astype(o_ref.dtype)


# ----------------------------------------------------------------------------
# wrappers (plain-JAX glue: layout / padding / tiling decisions)
# ----------------------------------------------------------------------------

@jax.jit
def downsample_conv(x_nchw, w_oihw, b):
    """Conv2d(Cin, Cout, kernel=3, stride=2, padding=1) on NCHW input."""
    N, Cin, H, W = x_nchw.shape
    Cout = w_oihw.shape[0]
    # PyTorch floor semantics (works for odd H/W too).
    Ho = (H - 1) // 2 + 1
    Wo = (W - 1) // 2 + 1
    Mh = Ho * Wo
    K = 9 * Cin
    cdt = jnp.bfloat16  # MXU operand dtype; accumulation is f32 in-kernel.

    # Spatial pad + bf16 cast once; everything stays channel-major (NCHW), so
    # the GEMM output is already NCHW and no output transpose pass is needed.
    xp = jnp.pad(x_nchw.astype(cdt), ((0, 0), (0, 0), (1, 1), (1, 1)))
    # K-major im2col slab (N, 9*Cin, Ho*Wo); K index = (kh*3 + kw)*Cin + ci.
    taps = [xp[:, :, kh:kh + 2 * Ho:2, kw:kw + 2 * Wo:2]
            for kh in range(3) for kw in range(3)]
    slab = jnp.concatenate(taps, axis=1).reshape(N, K, Mh)
    # Weights (Cout, Cin, 3, 3) -> (Cout, 9*Cin) in the matching K order.
    wmat = jnp.transpose(w_oihw, (0, 2, 3, 1)).reshape(Cout, K).astype(cdt)

    # ---- tiling ----------------------------------------------------------
    C_pad = _round_up(Cout, 8)                     # channel dim is a sublane dim
    tn = _pick_div(C_pad, (256, 128, 64, 32, 16, 8))

    if Mh < 128:
        Mh_pad, tm = Mh, Mh                        # full-dim (tiny) lane block
    else:
        Mh_pad = _round_up(Mh, 128)                # lane-dense output axis
        tm = _pick_div(Mh_pad, (512, 256, 128))

    if K <= 1024:
        K_pad = _round_up(K, 8)                    # sublane-align; single block
        tk = K_pad
    else:
        K_pad = _round_up(K, 128)
        tk = _pick_div(K_pad, (512, 256, 128))
    nk = K_pad // tk

    # v7x megacore: keep >= 2 parallel grid blocks when possible.
    if N * (C_pad // tn) * (Mh_pad // tm) < 2:
        if tm >= 256:
            tm //= 2
        elif tn >= 16:
            tn //= 2

    slab = jnp.pad(slab, ((0, 0), (0, K_pad - K), (0, Mh_pad - Mh)))
    wmat = jnp.pad(wmat, ((0, C_pad - Cout), (0, K_pad - K)))
    b2 = jnp.pad(b.astype(jnp.float32), (0, C_pad - Cout)).reshape(C_pad, 1)

    cj, ci = C_pad // tn, Mh_pad // tm

    if nk == 1:
        grid = (N, cj, ci)
        in_specs = [
            pl.BlockSpec((tn, K_pad), lambda n, j, i: (j, 0)),
            pl.BlockSpec((None, K_pad, tm), lambda n, j, i: (n, 0, i)),
            pl.BlockSpec((tn, 1), lambda n, j, i: (j, 0)),
        ]
        out_specs = pl.BlockSpec((None, tn, tm), lambda n, j, i: (n, j, i))
        scratch = []
        kernel = _conv_kernel_single_k
        semantics = ("parallel", "parallel", "parallel")
    else:
        grid = (N, cj, ci, nk)
        in_specs = [
            pl.BlockSpec((tn, tk), lambda n, j, i, k: (j, k)),
            pl.BlockSpec((None, tk, tm), lambda n, j, i, k: (n, k, i)),
            pl.BlockSpec((tn, 1), lambda n, j, i, k: (j, 0)),
        ]
        out_specs = pl.BlockSpec((None, tn, tm), lambda n, j, i, k: (n, j, i))
        scratch = [pltpu.VMEM((tn, tm), jnp.float32)]
        kernel = _conv_kernel_multi_k
        semantics = ("parallel", "parallel", "parallel", "arbitrary")

    out = pl.pallas_call(
        kernel,
        out_shape=jax.ShapeDtypeStruct((N, C_pad, Mh_pad), x_nchw.dtype),
        grid_spec=pltpu.PrefetchScalarGridSpec(
            num_scalar_prefetch=0,
            grid=grid,
            in_specs=in_specs,
            out_specs=out_specs,
            scratch_shapes=scratch),
        compiler_params=pltpu.CompilerParams(
            dimension_semantics=semantics,
            vmem_limit_bytes=32 * 1024 * 1024),
    )(wmat, slab, b2)

    # Free reshape when Cout % 8 == 0 and Ho*Wo is already 128-aligned (or tiny).
    return out[:, :Cout, :Mh].reshape(N, Cout, Ho, Wo)


@jax.jit
def downsample_avgpool(x_nchw):
    """AvgPool2d(kernel_size=2, stride=2) on NCHW input."""
    N, C, H, W = x_nchw.shape
    Ho, Wo = H // 2, W // 2                        # PyTorch floor semantics
    xs = x_nchw[:, :, :2 * Ho, :2 * Wo]            # no-op for even H, W
    R = N * C * Ho
    # Free (bitcast) view: one row = [even-h row (2*Wo) | odd-h row (2*Wo)].
    x2 = xs.reshape(R, 4 * Wo)

    # Constant pooling matrix: (x2 @ q)[r, wo] = mean of the 2x2 window.
    eye = np.eye(Wo, dtype=np.float32)
    q_half = np.repeat(eye, 2, axis=0) * 0.25      # (2*Wo, Wo)
    q = jnp.asarray(np.concatenate([q_half, q_half], axis=0),
                    dtype=x_nchw.dtype)            # (4*Wo, Wo)

    R_pad = _round_up(R, 8)
    if R_pad != R:
        x2 = jnp.pad(x2, ((0, R_pad - R), (0, 0)))

    # Row-tile choice: big blocks (amortize per-step overhead), VMEM-capped,
    # and >= 2 grid blocks when possible so both v7x TensorCores get work.
    row_bytes = 4 * Wo * x2.dtype.itemsize
    cands = [c for c in (2048, 1024, 512, 256, 128, 64, 32, 16, 8)
             if c <= R_pad and R_pad % c == 0
             and c * row_bytes <= 4 * 1024 * 1024]
    two_block = [c for c in cands if R_pad // c >= 2]
    tr = two_block[0] if two_block else (cands[0] if cands else R_pad)

    out = pl.pallas_call(
        _avgpool_kernel,
        out_shape=jax.ShapeDtypeStruct((R_pad, Wo), x_nchw.dtype),
        grid_spec=pltpu.PrefetchScalarGridSpec(
            num_scalar_prefetch=0,
            grid=(R_pad // tr,),
            in_specs=[
                pl.BlockSpec((tr, 4 * Wo), lambda i: (i, 0)),
                pl.BlockSpec((4 * Wo, Wo), lambda i: (0, 0)),
            ],
            out_specs=pl.BlockSpec((tr, Wo), lambda i: (i, 0)),
        ),
        compiler_params=pltpu.CompilerParams(
            dimension_semantics=("parallel",),
            vmem_limit_bytes=32 * 1024 * 1024),
    )(x2, q)

    return out[:R].reshape(N, C, Ho, Wo)


# ----------------------------------------------------------------------------
# module wrapper
# ----------------------------------------------------------------------------

class Downsample:
    """JAX/Pallas port of the PyTorch Downsample module (dims=2 path)."""

    def __init__(self, channels, use_conv, dims=2, out_channels=None,
                 padding=1, *, key=None):
        assert dims == 2, "only dims=2 implemented"
        assert padding == 1, "only padding=1 implemented"
        self.channels = channels
        self.out_channels = out_channels or channels
        self.use_conv = use_conv
        if use_conv:
            key = key if key is not None else jax.random.PRNGKey(0)
            kw, kb = jax.random.split(key)
            # Conv2d(channels, out_channels, 3): weight (Cout, Cin, 3, 3), bias (Cout,)
            self.weight = 0.1 * jax.random.normal(
                kw, (self.out_channels, self.channels, 3, 3), jnp.float32)
            self.bias = 0.1 * jax.random.normal(
                kb, (self.out_channels,), jnp.float32)
        else:
            assert self.channels == self.out_channels

    def __call__(self, x, y=None):
        assert x.shape[1] == self.channels
        if self.use_conv:
            return downsample_conv(x, self.weight, self.bias)
        return downsample_avgpool(x)


# ----------------------------------------------------------------------------
# Demo / correctness check
# ----------------------------------------------------------------------------

if __name__ == "__main__":
    key = jax.random.PRNGKey(0)
    kx, kmod = jax.random.split(key)

    N, C, H, W = 2, 4, 16, 16
    Cout = 8
    x = jax.random.normal(kx, (N, C, H, W), jnp.float32)

    # --- conv path (use_conv=True) ---
    ds_conv = Downsample(C, use_conv=True, dims=2, out_channels=Cout, key=kmod)
    out_conv = jax.block_until_ready(ds_conv(x))
    assert out_conv.shape == (N, Cout, H // 2, W // 2)

    # Reference with bf16-rounded operands (kernel feeds bf16 to the MXU,
    # accumulating in f32).
    xr = x.astype(jnp.bfloat16).astype(jnp.float32)
    wr = ds_conv.weight.astype(jnp.bfloat16).astype(jnp.float32)
    ref_conv = jax.lax.conv_general_dilated(
        xr, wr, window_strides=(2, 2), padding=((1, 1), (1, 1)),
        dimension_numbers=("NCHW", "OIHW", "NCHW"),
    ) + ds_conv.bias.reshape(1, Cout, 1, 1)
    np.testing.assert_allclose(np.asarray(out_conv), np.asarray(ref_conv),
                               rtol=2e-2, atol=2e-2)

    # --- avg-pool path (use_conv=False) ---
    ds_pool = Downsample(C, use_conv=False, dims=2)
    out_pool = jax.block_until_ready(ds_pool(x))
    assert out_pool.shape == (N, C, H // 2, W // 2)

    ref_pool = x.reshape(N, C, H // 2, 2, W // 2, 2).mean(axis=(3, 5))
    np.testing.assert_allclose(np.asarray(out_pool), np.asarray(ref_pool),
                               rtol=2e-2, atol=2e-2)

    print("KERNEL_OK")
</pallas_src>

<mosaic_0001>
module attributes {stable_mosaic.version = 11 : i64} {
  func.func @_conv_kernel_single_k(%arg0: i32, %arg1: i32, %arg2: i32, %arg3: memref<8x40xbf16, #tpu.memory_space<vmem>>, %arg4: memref<1x40x64xbf16, #tpu.memory_space<vmem>>, %arg5: memref<8x1xf32, #tpu.memory_space<vmem>>, %arg6: memref<1x8x64xf32, #tpu.memory_space<vmem>>) attributes {dimension_semantics = [#tpu.dimension_semantics<parallel>, #tpu.dimension_semantics<parallel>, #tpu.dimension_semantics<parallel>], iteration_bounds = array<i64: 2, 1, 1>, scalar_prefetch = 0 : i64, scratch_operands = 0 : i64, tpu.core_type = #tpu.core_type<tc>, window_params = [{transform_indices = @transform_0, window_bounds = array<i64: 8, 40>}, {transform_indices = @transform_1, window_bounds = array<i64: 1, 40, 64>}, {transform_indices = @transform_2, window_bounds = array<i64: 8, 1>}, {transform_indices = @transform_3, window_bounds = array<i64: 1, 8, 64>}]} {
    %c0 = arith.constant 0 : index
    %c0_0 = arith.constant 0 : index
    %0 = vector.load %arg3[%c0, %c0_0] : memref<8x40xbf16, #tpu.memory_space<vmem>>, vector<8x40xbf16>
    %c0_1 = arith.constant 0 : index
    %c0_2 = arith.constant 0 : index
    %c0_3 = arith.constant 0 : index
    %1 = vector.load %arg4[%c0_1, %c0_2, %c0_3] : memref<1x40x64xbf16, #tpu.memory_space<vmem>>, vector<1x40x64xbf16>
    %2 = vector.shape_cast %1 : vector<1x40x64xbf16> to vector<40x64xbf16>
    %cst = arith.constant dense<0.000000e+00> : vector<8x64xf32>
    %3 = tpu.matmul %0, %2, %cst {dimension_numbers = #tpu.dot_dimension_numbers<[1], [0], [0], [1], [0, 0, 1, 1], [], []>} : vector<8x40xbf16>, vector<40x64xbf16>, vector<8x64xf32> -> vector<8x64xf32>
    %c0_4 = arith.constant 0 : index
    %c0_5 = arith.constant 0 : index
    %4 = vector.load %arg5[%c0_4, %c0_5] : memref<8x1xf32, #tpu.memory_space<vmem>>, vector<8x1xf32>
    %5 = vector.broadcast %4 : vector<8x1xf32> to vector<8x64xf32>
    %6 = arith.addf %3, %5 : vector<8x64xf32>
    %c0_6 = arith.constant 0 : index
    %c0_7 = arith.constant 0 : index
    %c0_8 = arith.constant 0 : index
    %7 = vector.load %arg6[%c0_6, %c0_7, %c0_8] : memref<1x8x64xf32, #tpu.memory_space<vmem>>, vector<1x8x64xf32>
    %8 = vector.shape_cast %7 : vector<1x8x64xf32> to vector<8x64xf32>
    %9 = vector.shape_cast %6 : vector<8x64xf32> to vector<1x8x64xf32>
    tpu.vector_store %arg6[%c0_6, %c0_7, %c0_8], %9 {strides = array<i32>} : memref<1x8x64xf32, #tpu.memory_space<vmem>>, vector<1x8x64xf32>,
    return
  }
  func.func @transform_0(%arg0: i32, %arg1: i32, %arg2: i32) -> (i32, i32) {
    %c0_i32 = arith.constant 0 : i32
    %c0_i32_0 = arith.constant 0 : i32
    return %arg1, %c0_i32 : i32, i32
  }
  func.func @transform_1(%arg0: i32, %arg1: i32, %arg2: i32) -> (i32, i32, i32) {
    %c0_i32 = arith.constant 0 : i32
    %c0_i32_0 = arith.constant 0 : i32
    return %arg0, %c0_i32, %arg2 : i32, i32, i32
  }
  func.func @transform_2(%arg0: i32, %arg1: i32, %arg2: i32) -> (i32, i32) {
    %c0_i32 = arith.constant 0 : i32
    %c0_i32_0 = arith.constant 0 : i32
    return %arg1, %c0_i32 : i32, i32
  }
  func.func @transform_3(%arg0: i32, %arg1: i32, %arg2: i32) -> (i32, i32, i32) {
    %c0_i32 = arith.constant 0 : i32
    return %arg0, %arg1, %arg2 : i32, i32, i32
  }
}

</mosaic_0001>

<llo_original>
// kernel: downsample_conv.1
$region0: #{downsample_conv.1}
  #allocation0 [shape = 'u32[]', space=smem, size = 0x4, offset = 0x4, fixed_abs, tag = 'smem constant byte address 0x4 - core index']
  #allocation1 [shape = 'u32[144,128]{1,0:T(1,128)}', space=vmem, size = 0x12000, scoped, tag = 'internal scratch']
  %s0 = inlined_call_operand.vmem [shape: bf16[8,40], index: 0, kind: input, shape index: {}]
  %s1 = inlined_call_operand.vmem [shape: bf16[2,40,64], index: 1, kind: input, shape index: {}]
  %s2 = inlined_call_operand.vmem [shape: f32[8,1], index: 2, kind: input, shape index: {}]
  %s3 = inlined_call_operand.vmem [shape: f32[2,8,64], index: 3, kind: output, shape index: {}]
  %s4 = sld [smem:[#allocation0]]
  $region45: #{downsample_conv.1} parent=0
    _
  %s6 = ssub.s32 1, %s4
  %s7 = scalar_select 0, %s6, %s4
  loop: start=0, step=1, limit=4
  $region2: #{downsample_conv.1} parent=0 // loop_pre_header
    _
  $region3: #{downsample_conv.1} parent=0 // loop_header
    %s9 = sphi 0, %s13
    %p10 = scmp.ge.s32.totalorder %s9, 4
    %s16 = sphi 0, %s35
    %s17 = sphi 0, %s31
    %s18 = sphi 0, %s27
    %s19 = sphi 0, %s16
    %s20 = sphi 0, %s17
    %s21 = sphi 0, %s18
    %s22 = sphi 0, %s19
    %s23 = sphi 0, %s20
    %s24 = sphi 0, %s21
    %s38 = sphi 0, %s40
    %s41 = sphi 0, %s38
    %s42 = sphi 0, %s41
    %s58 = sphi 0, %s42
    %s66 = sphi 0, %s68
    %s69 = sphi 0, %s66
    %s70 = sphi 0, %s69
    %s86 = sphi 0, %s70
    %s92 = sphi 0, %s94
    %s95 = sphi 0, %s92
    %s96 = sphi 0, %s95
    %s112 = sphi 0, %s96
    %s122 = sphi 0, %s124
    %s125 = sphi 0, %s122
    %s126 = sphi 0, %s125
    %s142 = sphi 0, %s126
  $region4: #{downsample_conv.1} parent=0 // loop_header_branch
    %12 = sbr.rel (%p10) target = $region8
  $region5: #{downsample_conv.1} parent=0 // loop_body
    %s14 = ssub.s32 %s9, 1
    %s15 = ssub.s32 %s9, 2
    %s25 = sadd.s32 1, %s18
    %p26 = scmp.ge.s32.totalorder %s25, 1
    %s27 = scalar_select %p26, 0, %s25
    %s28 = sadd.s32 1, %s17
    %s29 = scalar_select %p26, %s28, %s17
    %p30 = scmp.ge.s32.totalorder %s29, 1
    %s31 = scalar_select %p30, 0, %s29
    %s32 = sadd.s32 1, %s16
    %s33 = scalar_select %p30, %s32, %s16
    %p34 = scmp.ge.s32.totalorder %s33, 2
    %s35 = scalar_select %p34, 0, %s33
    %s36 = ssub.s32 %s17, %s31
    %p37 = scmp.eq.s32.totalorder %s36, 0
    %s39 = sadd.s32 %s38, 1
    %s40 = scalar_select %p37, %s38, %s39
    %p43 = pneg %p37
    %p44 = scmp.eq.s32.totalorder %s9, 1
    %p45 = por %p43, %p44
    %p46 = scmp.ne.s32.totalorder %s38, %s41
    %p47 = scmp.eq.s32.totalorder %s9, 0
    %p48 = por %p46, %p47
    %p49 = scmp.ne.s32.totalorder %s38, %s41
    %p50 = scmp.eq.s32.totalorder %s14, 1
    %p51 = por %p49, %p50
    %p52 = scmp.ne.s32.totalorder %s41, %s42
    %p53 = scmp.eq.s32.totalorder %s14, 0
    %p54 = por %p52, %p53
    %p55 = scmp.ne.s32.totalorder %s41, %s42
    %p56 = scmp.eq.s32.totalorder %s15, 1
    %p57 = por %p55, %p56
    %p59 = scmp.ne.s32.totalorder %s42, %s58
    %p60 = scmp.eq.s32.totalorder %s15, 0
    %p61 = por %p59, %p60
    %s62 = ssub.s32 %s16, %s35
    %s63 = ssub.s32 %s18, %s27
    %s64 = sor.u32 %s62, %s63
    %p65 = scmp.eq.s32.totalorder %s64, 0
    %s67 = sadd.s32 %s66, 1
    %s68 = scalar_select %p65, %s66, %s67
    %p71 = pneg %p65
    %p72 = scmp.eq.s32.totalorder %s9, 1
    %p73 = por %p71, %p72
    %p74 = scmp.ne.s32.totalorder %s66, %s69
    %p75 = scmp.eq.s32.totalorder %s9, 0
    %p76 = por %p74, %p75
    %p77 = scmp.ne.s32.totalorder %s66, %s69
    %p78 = scmp.eq.s32.totalorder %s14, 1
    %p79 = por %p77, %p78
    %p80 = scmp.ne.s32.totalorder %s69, %s70
    %p81 = scmp.eq.s32.totalorder %s14, 0
    %p82 = por %p80, %p81
    %p83 = scmp.ne.s32.totalorder %s69, %s70
    %p84 = scmp.eq.s32.totalorder %s15, 1
    %p85 = por %p83, %p84
    %p87 = scmp.ne.s32.totalorder %s70, %s86
    %p88 = scmp.eq.s32.totalorder %s15, 0
    %p89 = por %p87, %p88
    %s90 = ssub.s32 %s17, %s31
    %p91 = scmp.eq.s32.totalorder %s90, 0
    %s93 = sadd.s32 %s92, 1
    %s94 = scalar_select %p91, %s92, %s93
    %p97 = pneg %p91
    %p98 = scmp.eq.s32.totalorder %s9, 1
    %p99 = por %p97, %p98
    %p100 = scmp.ne.s32.totalorder %s92, %s95
    %p101 = scmp.eq.s32.totalorder %s9, 0
    %p102 = por %p100, %p101
    %p103 = scmp.ne.s32.totalorder %s92, %s95
    %p104 = scmp.eq.s32.totalorder %s14, 1
    %p105 = por %p103, %p104
    %p106 = scmp.ne.s32.totalorder %s95, %s96
    %p107 = scmp.eq.s32.totalorder %s14, 0
    %p108 = por %p106, %p107
    %p109 = scmp.ne.s32.totalorder %s95, %s96
    %p110 = scmp.eq.s32.totalorder %s15, 1
    %p111 = por %p109, %p110
    %p113 = scmp.ne.s32.totalorder %s96, %s112
    %p114 = scmp.eq.s32.totalorder %s15, 0
    %p115 = por %p113, %p114
    %s116 = ssub.s32 %s16, %s35
    %s117 = ssub.s32 %s17, %s31
    %s118 = sor.u32 %s116, %s117
    %s119 = ssub.s32 %s18, %s27
    %s120 = sor.u32 %s118, %s119
    %p121 = scmp.eq.s32.totalorder %s120, 0
    %s123 = sadd.s32 %s122, 1
    %s124 = scalar_select %p121, %s122, %s123
    %p127 = pneg %p121
    %p128 = scmp.eq.s32.totalorder %s9, 1
    %p129 = por %p127, %p128
    %p130 = scmp.ne.s32.totalorder %s122, %s125
    %p131 = scmp.eq.s32.totalorder %s9, 0
    %p132 = por %p130, %p131
    %p133 = scmp.ne.s32.totalorder %s122, %s125
    %p134 = scmp.eq.s32.totalorder %s14, 1
    %p135 = por %p133, %p134
    %p136 = scmp.ne.s32.totalorder %s125, %s126
    %p137 = scmp.eq.s32.totalorder %s14, 0
    %p138 = por %p136, %p137
    %p139 = scmp.ne.s32.totalorder %s125, %s126
    %p140 = scmp.eq.s32.totalorder %s15, 1
    %p141 = por %p139, %p140
    %p143 = scmp.ne.s32.totalorder %s126, %s142
    %p144 = scmp.eq.s32.totalorder %s15, 0
    %p145 = por %p143, %p144
    %p146 = scmp.le.s32.totalorder 1, %s9
    %p147 = scmp.lt.s32.totalorder %s9, 3
    %p148 = pnand %p146, %p147
    %p149 = pneg %p148
    // Predicated region
    $region9: #{downsample_conv.1} parent=5 // pred_check
      _
    $region10: #{downsample_conv.1} parent=5 // pred_check_branch
      %151 = sbr.rel (%p148) target = $region12
    $region11: #{downsample_conv.1} parent=5 // pred_region
      %s152 = ssub.s32 %s9, 1
      // Predicated region
      $region13: #{downsample_conv.1} parent=11 // pred_check
        %p153 = pneg %p54
      $region14: #{downsample_conv.1} parent=11 // pred_check_branch
        %155 = sbr.rel (%p153) target = $region16
      $region15: #{downsample_conv.1} parent=11 // pred_region
        %p156 = scmp.lt.s32.totalorder %s20, 0
        %s157 = scalar_select %p156, %s20, 0
        %s158 = smul.addr %s157, 4
        %s159 = scalar_lea.vmem %s0, %s158
      $region16: #{downsample_conv.1} parent=11 // pred_fallthru
        _
      // Predicated region
      $region17: #{downsample_conv.1} parent=11 // pred_check
        %p160 = pneg %p108
      $region18: #{downsample_conv.1} parent=11 // pred_check_branch
        %162 = sbr.rel (%p160) target = $region20
      $region19: #{downsample_conv.1} parent=11 // pred_region
        %p163 = scmp.lt.s32.totalorder %s20, 0
        %s164 = scalar_select %p163, %s20, 0
        %s165 = smul.addr %s164, 8
        %s166 = scalar_lea.vmem %s2, %s165
      $region20: #{downsample_conv.1} parent=11 // pred_fallthru
        _
    $region12: #{downsample_conv.1} parent=5 // pred_fallthru
      _
    %p167 = scmp.lt.s32.totalorder %s9, 2
    // Predicated region
    $region21: #{downsample_conv.1} parent=5 // pred_check
      %p168 = pneg %p167
    $region22: #{downsample_conv.1} parent=5 // pred_check_branch
      %170 = sbr.rel (%p168) target = $region24
    $region23: #{downsample_conv.1} parent=5 // pred_region
      // Predicated region
      $region25: #{downsample_conv.1} parent=23 // pred_check
        %p171 = pneg %p76
      $region26: #{downsample_conv.1} parent=23 // pred_check_branch
        %173 = sbr.rel (%p171) target = $region28
      $region27: #{downsample_conv.1} parent=23 // pred_region
        %p174 = scmp.lt.s32.totalorder %s16, 1
        %s175 = scalar_select %p174, %s16, 1
        %p176 = scmp.lt.s32.totalorder %s18, 0
        %s177 = scalar_select %p176, %s18, 0
        %s178 = smul.addr %s175, 5
        %s179 = sadd.s32 %s177, %s178
        %s180 = smul.addr %s179, 4
        %s181 = scalar_lea.vmem %s1, %s180
      $region28: #{downsample_conv.1} parent=23 // pred_fallthru
        _
    $region24: #{downsample_conv.1} parent=5 // pred_fallthru
      _
    %p182 = scmp.le.s32.totalorder 1, %s9
    %p183 = scmp.lt.s32.totalorder %s9, 3
    %p184 = pnand %p182, %p183
    %p185 = pneg %p184
    // Predicated region
    $region29: #{downsample_conv.1} parent=5 // pred_check
      _
    $region30: #{downsample_conv.1} parent=5 // pred_check_branch
      %187 = sbr.rel (%p184) target = $region32
    $region31: #{downsample_conv.1} parent=5 // pred_region
      %s188 = ssub.s32 %s9, 1
      %p189 = scmp.lt.s32.totalorder %s20, 0
      %s190 = scalar_select %p189, %s20, 0
      %s191 = smul.addr %s190, 4
      %s192 = scalar_lea.vmem %s0, %s191
      %p193 = pneg %p54
      %p194 = pneg %p51
      %p195 = scmp.lt.s32.totalorder %s19, 1
      %s196 = scalar_select %p195, %s19, 1
      %p197 = scmp.lt.s32.totalorder %s21, 0
      %s198 = scalar_select %p197, %s21, 0
      %s199 = smul.addr %s196, 5
      %s200 = sadd.s32 %s198, %s199
      %s201 = smul.addr %s200, 4
      %s202 = scalar_lea.vmem %s1, %s201
      %p203 = pneg %p82
      %p204 = pneg %p79
      %p205 = scmp.lt.s32.totalorder %s20, 0
      %s206 = scalar_select %p205, %s20, 0
      %s207 = smul.addr %s206, 8
      %s208 = scalar_lea.vmem %s2, %s207
      %p209 = pneg %p108
      %p210 = pneg %p105
      %p211 = pneg %p138
      %p212 = pneg %p135
      %p213 = scmp.lt.s32.totalorder %s19, 1
      %s214 = scalar_select %p213, %s19, 1
      %p215 = scmp.lt.s32.totalorder %s20, 0
      %s216 = scalar_select %p215, %s20, 0
      %p217 = scmp.lt.s32.totalorder %s21, 0
      %s218 = scalar_select %p217, %s21, 0
      %s219 = sadd.s32 %s218, %s216
      %s220 = sadd.s32 %s219, %s214
      %s221 = smul.addr %s220, 8
      %s222 = scalar_lea.vmem %s3, %s221
      %p223 = scmp.lt.s32.totalorder %s20, 0
      %s224 = scalar_select %p223, %s20, 0
      %s225 = smul.addr %s224, 4
      %s226 = scalar_lea.vmem %s0, %s225
      %p227 = scmp.lt.s32.totalorder %s19, 1
      %s228 = scalar_select %p227, %s19, 1
      %p229 = scmp.lt.s32.totalorder %s21, 0
      %s230 = scalar_select %p229, %s21, 0
      %s231 = smul.addr %s228, 5
      %s232 = sadd.s32 %s230, %s231
      %s233 = smul.addr %s232, 4
      %s234 = scalar_lea.vmem %s1, %s233
      %p235 = scmp.lt.s32.totalorder %s20, 0
      %s236 = scalar_select %p235, %s20, 0
      %s237 = smul.addr %s236, 8
      %s238 = scalar_lea.vmem %s2, %s237
      %p239 = scmp.lt.s32.totalorder %s19, 1
      %s240 = scalar_select %p239, %s19, 1
      %p241 = scmp.lt.s32.totalorder %s20, 0
      %s242 = scalar_select %p241, %s20, 0
      %p243 = scmp.lt.s32.totalorder %s21, 0
      %s244 = scalar_select %p243, %s21, 0
      %s245 = sadd.s32 %s244, %s242
      %s246 = sadd.s32 %s245, %s240
      %s247 = smul.addr %s246, 8
      %s248 = scalar_lea.vmem %s3, %s247
      %v250 = vld [vmem:[%s226] sm:$0xf]
      %v251 = vld [vmem:[%s234] sm:$0xf]
      %v252 = vld [vmem:[%s234 + $0x4] sm:$0xf]
      %v253 = vld [vmem:[%s234 + $0x8] sm:$0xf]
      %v254 = vld [vmem:[%s234 + $0xc] sm:$0xf]
      %v255 = vld [vmem:[%s234 + $0x10] sm:$0xf]
      %v256 = vld [vmem:[%s238] sm:$0xff]
      %258 = vset.pattern.permute.xlu0 0
      %259 = vperm.xlu0 %258, %v256
      %v260 = vpop.permute.xlu0 %259
      %v267 = vunpack.c.l.b16 %v251
      %v268 = vunpack.c.l.b16 %v252
      %v269 = vunpack.c.l.b16 %v253
      %v270 = vunpack.c.l.b16 %v254
      %v271 = vunpack.c.l.b16 %v255
      %v272 = vpack.c.b16 %v268, %v267
      %v273 = vpack.c.b16 %v270, %v269
      %v274 = vpack.c.b16 %v271, %v271
      %vm277 = vcmask 326656
      %v279 = vsel %vm277, %v250, 0
      %vm281 = vcmask 1043456
      %v283 = vsel %vm281, %v274, 0
      %285 = vmatprep.subr.bf16.mxu0 0
      %286 = vmatpush1.bf16.msra.mxu0 %v272
      %287 = vmatprep.subr.bf16.mxu0 0
      %288 = vmatpush1.bf16.msra.mxu0 %v273
      %289 = vmatprep.subr.bf16.mxu0 0
      %290 = vmatpush1.bf16.msra.mxu0 %v283
      %291 = vmatprep.subr.bf16.mxu0 0
      %292 = vmatpush1.bf16.msra.mxu0 0
      %293 = vmatprep.subr.bf16.mxu0 0
      %294 = vmatpush1.bf16.msra.mxu0 0
      %295 = vmatprep.subr.bf16.mxu0 0
      %296 = vmatpush1.bf16.msra.mxu0 0
      %297 = vmatprep.subr.bf16.mxu0 0
      %298 = vmatpush1.bf16.msra.mxu0 0
      %299 = vmatprep.subr.bf16.mxu0 0
      %300 = vmatpush1.bf16.msra.mxu0 0
      %301 = vmatprep.subr.bf16.mxu0 0
      %302 = vmatpush1.bf16.msra.mxu0 0
      %303 = vmatprep.subr.bf16.mxu0 0
      %304 = vmatpush1.bf16.msra.mxu0 0
      %305 = vmatprep.subr.bf16.mxu0 0
      %306 = vmatpush1.bf16.msra.mxu0 0
      %307 = vmatprep.subr.bf16.mxu0 0
      %308 = vmatpush1.bf16.msra.mxu0 0
      %309 = vmatprep.subr.bf16.mxu0 0
      %310 = vmatpush1.bf16.msra.mxu0 0
      %311 = vmatprep.subr.bf16.mxu0 0
      %312 = vmatpush1.bf16.msra.mxu0 0
      %313 = vmatprep.subr.bf16.mxu0 0
      %314 = vmatpush1.bf16.msra.mxu0 0
      %315 = vmatprep.subr.bf16.mxu0 0
      %316 = vmatpush1.bf16.msra.mxu0 0
      %317 = vmatprep.mubr.bf16.mxu0 0
      %318 = vmatmul.mubr.bf16.gmra.mrb[0].mxu0 %v279
      %v319 = vpop.f32.mrb[0].mxu0
      %v320 = vadd.f32 %v260, %v319
      %v321 = vpop.f32.mrb[0].mxu0
      %v322 = vpop.f32.mrb[0].mxu0
      %v323 = vpop.f32.mrb[0].mxu0
      %324 = vdwg.mxu0
      %vm325 = vcmask 523264
      %326 = vst.msk [vmem:[%s248] sm:$0xff] %vm325, %v320
      %p327 = scmp.lt.s32.totalorder %s19, 1
      %s328 = scalar_select %p327, %s19, 1
      %p329 = scmp.lt.s32.totalorder %s20, 0
      %s330 = scalar_select %p329, %s20, 0
      %p331 = scmp.lt.s32.totalorder %s21, 0
      %s332 = scalar_select %p331, %s21, 0
      %s333 = sadd.s32 %s332, %s330
      %s334 = sadd.s32 %s333, %s328
      %s335 = smul.addr %s334, 8
      %s336 = scalar_lea.vmem %s3, %s335
      // Predicated region
      $region33: #{downsample_conv.1} parent=31 // pred_check
        %p337 = pneg %p135
      $region34: #{downsample_conv.1} parent=31 // pred_check_branch
        %339 = sbr.rel (%p337) target = $region36
      $region35: #{downsample_conv.1} parent=31 // pred_region
        _
      $region36: #{downsample_conv.1} parent=31 // pred_fallthru
        _
    $region32: #{downsample_conv.1} parent=5 // pred_fallthru
      _
    %p340 = scmp.le.s32.totalorder 2, %s9
    // Predicated region
    $region37: #{downsample_conv.1} parent=5 // pred_check
      %p341 = pneg %p340
    $region38: #{downsample_conv.1} parent=5 // pred_check_branch
      %343 = sbr.rel (%p341) target = $region40
    $region39: #{downsample_conv.1} parent=5 // pred_region
      %s344 = ssub.s32 %s9, 2
      // Predicated region
      $region41: #{downsample_conv.1} parent=39 // pred_check
        %p345 = pneg %p141
      $region42: #{downsample_conv.1} parent=39 // pred_check_branch
        %347 = sbr.rel (%p345) target = $region44
      $region43: #{downsample_conv.1} parent=39 // pred_region
        %p348 = scmp.lt.s32.totalorder %s22, 1
        %s349 = scalar_select %p348, %s22, 1
        %p350 = scmp.lt.s32.totalorder %s23, 0
        %s351 = scalar_select %p350, %s23, 0
        %p352 = scmp.lt.s32.totalorder %s24, 0
        %s353 = scalar_select %p352, %s24, 0
        %s354 = sadd.s32 %s353, %s351
        %s355 = sadd.s32 %s354, %s349
        %s356 = smul.addr %s355, 8
        %s357 = scalar_lea.vmem %s3, %s356
      $region44: #{downsample_conv.1} parent=39 // pred_fallthru
        _
    $region40: #{downsample_conv.1} parent=5 // pred_fallthru
      _
  $region6: #{downsample_conv.1} parent=0 // loop_footer
    %s13 = sadd.s32 1, %s9
  $region7: #{downsample_conv.1} parent=0 // loop_footer_branch
    %8 = sbr.rel target = $region3
  $region8: #{downsample_conv.1} parent=0 // loop_exit
    _

</llo_original>
